<compile_context>
chip_gen: v6e
topology: v6e:2x2x1
jax: 0.10.0
libtpu: 0.0.40
codegen_flags: <defaults>
</compile_context>

<pallas_src>
import functools

import jax
import jax.numpy as jnp
from jax.experimental import pallas as pl
from jax.experimental.pallas import tpu as pltpu

CHANNEL = 14
RATIO = 7
HIDDEN = CHANNEL // RATIO  # = 2

_MAX_TILE_HW = 8192  # lanes per block in the two-pass fallback (multiple of 128)


# --------------------------- generation-aware config -------------------------
def _tpu_generation():
    try:
        kind = jax.devices()[0].device_kind.lower()
    except Exception:
        return "unknown"
    if "v5 lite" in kind or "v5e" in kind or "v5litepod" in kind:
        return "v5e"
    if "v6" in kind:
        return "v6e"
    if "v7" in kind or "7x" in kind:
        return "v7x"
    return "unknown"


def _hw_config():
    """Returns (target_block_bytes, vmem_limit_bytes, bf16_native_mul, two_tc)."""
    gen = _tpu_generation()
    if gen == "v5e":   # 128 MiB physical VMEM, slower HBM, no bf16 VALU
        return 3 << 20, 40 << 20, False, False
    if gen == "v6e":   # 128 MiB physical VMEM, 1.4 TB/s HBM
        return 8 << 20, 64 << 20, True, False
    if gen == "v7x":   # only 64 MiB physical VMEM, 3.2 TB/s HBM, 2 TCs
        return 6 << 20, 40 << 20, True, True
    return 4 << 20, 40 << 20, True, False


# ------------------------------ fused AWL kernel ----------------------------
def _fused_awl_kernel(w1_ref, b1_ref, w2t_ref, b2_ref, x_ref, o_ref, *,
                      inv_hw, native_mul):
    """Resident block: sum -> mean -> FC -> ReLU -> FC -> sigmoid -> scale.

    x_ref/o_ref: (B, C, HW).  w1/w2t: (HIDDEN, C, 1).  b1: (HIDDEN, 1, 1).
    b2: (1, C, 1).  All weight refs are grid-invariant VMEM residents.
    """
    x = x_ref[...]
    xf = x.astype(jnp.float32)
    # per-sample, per-channel spatial mean (cross-lane reduce, XLU)
    mean = jnp.sum(xf, axis=2, keepdims=True) * inv_hw        # (B, C, 1) f32

    w1 = w1_ref[...]
    b1 = b1_ref[...]
    w2t = w2t_ref[...]
    b2 = b2_ref[...]

    # 14 -> 2 -> 14 excitation, unrolled over the 2 hidden units (56 MACs,
    # pure VPU + sublane reduce; never touches the MXU).
    pre = jnp.zeros_like(mean)                                 # (B, C, 1)
    for j in range(HIDDEN):                                    # static unroll
        hj = jnp.sum(mean * w1[j:j + 1], axis=1, keepdims=True) + b1[j:j + 1]
        hj = jnp.maximum(hj, 0.0)                              # (B, 1, 1)
        pre = pre + hj * w2t[j:j + 1]                          # (B, C, 1)
    gate = jax.nn.sigmoid(pre + b2)                            # (B, C, 1) f32

    if native_mul:
        o_ref[...] = (x * gate.astype(x.dtype)).astype(o_ref.dtype)
    else:
        o_ref[...] = (xf * gate).astype(o_ref.dtype)


def _awl_fused(x, w1, b1, w2, b2, *, target_bytes, vmem_limit, native_mul,
               two_tc):
    """Fused AWL.  x: (N, C, HW) -> (N, C, HW) in x.dtype."""
    n, c, hw = x.shape
    itemsize = jnp.dtype(x.dtype).itemsize
    sample_bytes = c * hw * itemsize

    # ~5x block footprint (2 in-bufs + 2 out-bufs + temporaries) must fit.
    max_b = max(1, (vmem_limit - (2 << 20)) // (5 * sample_bytes))
    b_tile = max(1, min(n, max(1, target_bytes // sample_bytes), max_b))
    if two_tc and n >= 2:
        b_tile = min(b_tile, -(-n // 2))   # >= 2 grid steps -> both TCs busy
    grid = (pl.cdiv(n, b_tile),)

    w1_3d = w1.astype(jnp.float32).reshape(HIDDEN, CHANNEL, 1)
    b1_3d = b1.astype(jnp.float32).reshape(HIDDEN, 1, 1)
    w2t_3d = w2.T.astype(jnp.float32).reshape(HIDDEN, CHANNEL, 1)
    b2_3d = b2.astype(jnp.float32).reshape(1, CHANNEL, 1)

    kernel = functools.partial(_fused_awl_kernel, inv_hw=1.0 / hw,
                               native_mul=native_mul)
    return pl.pallas_call(
        kernel,
        out_shape=jax.ShapeDtypeStruct((n, c, hw), x.dtype),
        grid_spec=pltpu.PrefetchScalarGridSpec(
            num_scalar_prefetch=0,
            grid=grid,
            in_specs=[
                pl.BlockSpec((HIDDEN, c, 1), lambda b: (0, 0, 0)),   # w1
                pl.BlockSpec((HIDDEN, 1, 1), lambda b: (0, 0, 0)),   # b1
                pl.BlockSpec((HIDDEN, c, 1), lambda b: (0, 0, 0)),   # w2^T
                pl.BlockSpec((1, c, 1), lambda b: (0, 0, 0)),        # b2
                pl.BlockSpec((b_tile, c, hw), lambda b: (b, 0, 0)),  # x
            ],
            out_specs=pl.BlockSpec((b_tile, c, hw), lambda b: (b, 0, 0)),
        ),
        compiler_params=pltpu.CompilerParams(
            dimension_semantics=("parallel",),
            vmem_limit_bytes=vmem_limit),
    )(w1_3d, b1_3d, w2t_3d, b2_3d, x)


# ------------------------- two-pass fallback (huge HW) -----------------------
def _choose_tiles(n, c, hw, itemsize, target_bytes):
    tile_hw = hw if hw <= _MAX_TILE_HW else _MAX_TILE_HW  # full-extent or x128
    row_bytes = c * tile_hw * itemsize
    b_tile = max(1, min(n, target_bytes // max(row_bytes, 1)))
    return b_tile, tile_hw


def _sum_kernel(x_ref, s_ref, *, hw, tile_hw, needs_mask):
    """x_ref: (B, C, T) -> s_ref: (B, C, 1) accumulated over the HW grid axis."""
    t = pl.program_id(1)

    @pl.when(t == 0)
    def _():
        s_ref[...] = jnp.zeros_like(s_ref)

    x = x_ref[...].astype(jnp.float32)
    if needs_mask:
        last = pl.num_programs(1) - 1

        @pl.when(t == last)        # tail mask only on the final HW tile
        def _():
            lane = jax.lax.broadcasted_iota(jnp.int32, x.shape, 2)
            xm = jnp.where(t * tile_hw + lane < hw, x, 0.0)
            s_ref[...] += jnp.sum(xm, axis=2, keepdims=True)

        @pl.when(t != last)
        def _():
            s_ref[...] += jnp.sum(x, axis=2, keepdims=True)
    else:
        s_ref[...] += jnp.sum(x, axis=2, keepdims=True)


def _scale_kernel(x_ref, g_ref, o_ref, *, native_mul):
    """x_ref: (B, C, T), g_ref: (B, C, 1) -> o_ref = x * g (lane broadcast)."""
    x = x_ref[...]
    if native_mul:
        o_ref[...] = (x * g_ref[...].astype(x.dtype)).astype(o_ref.dtype)
    else:
        o_ref[...] = (x.astype(jnp.float32) * g_ref[...]).astype(o_ref.dtype)


def _awl_two_pass(x, w1, b1, w2, b2, *, target_bytes, vmem_limit, native_mul):
    n, c, hw = x.shape
    itemsize = jnp.dtype(x.dtype).itemsize
    b_tile, tile_hw = _choose_tiles(n, c, hw, itemsize, target_bytes)
    grid = (pl.cdiv(n, b_tile), pl.cdiv(hw, tile_hw))

    sums = pl.pallas_call(
        functools.partial(_sum_kernel, hw=hw, tile_hw=tile_hw,
                          needs_mask=(hw % tile_hw) != 0),
        out_shape=jax.ShapeDtypeStruct((n, c, 1), jnp.float32),
        grid_spec=pltpu.PrefetchScalarGridSpec(
            num_scalar_prefetch=0,
            grid=grid,
            in_specs=[pl.BlockSpec((b_tile, c, tile_hw), lambda b, t: (b, 0, t))],
            out_specs=pl.BlockSpec((b_tile, c, 1), lambda b, t: (b, 0, 0)),
        ),
        compiler_params=pltpu.CompilerParams(
            dimension_semantics=("parallel", "arbitrary"),
            vmem_limit_bytes=vmem_limit),
    )(x)

    # tiny 14->2->14 excite (56 MACs) in plain JAX, off the hot loop
    mean = sums[:, :, 0] * (1.0 / hw)                              # (N, C) f32
    h = jnp.maximum(mean @ w1.T.astype(jnp.float32) + b1.astype(jnp.float32), 0.0)
    gate = jax.nn.sigmoid(h @ w2.T.astype(jnp.float32) + b2.astype(jnp.float32))
    gate = gate.reshape(n, c, 1).astype(jnp.float32)

    return pl.pallas_call(
        functools.partial(_scale_kernel, native_mul=native_mul),
        out_shape=jax.ShapeDtypeStruct((n, c, hw), x.dtype),
        grid_spec=pltpu.PrefetchScalarGridSpec(
            num_scalar_prefetch=0,
            grid=grid,
            in_specs=[
                pl.BlockSpec((b_tile, c, tile_hw), lambda b, t: (b, 0, t)),
                pl.BlockSpec((b_tile, c, 1), lambda b, t: (b, 0, 0)),
            ],
            out_specs=pl.BlockSpec((b_tile, c, tile_hw), lambda b, t: (b, 0, t)),
        ),
        compiler_params=pltpu.CompilerParams(
            dimension_semantics=("parallel", "parallel"),
            vmem_limit_bytes=vmem_limit),
    )(x, gate)


# ----------------------------- AWL forward ----------------------------------
def aux_weight_layer_pallas(x_nchw, w1, b1, w2, b2, *, force_two_pass=False):
    """AWL forward. x_nchw: (N, C, H, W) -> (N, C, H, W)."""
    n, c, h, w = x_nchw.shape
    assert c == CHANNEL
    hw = h * w
    x = x_nchw.reshape(n, c, hw)

    target_bytes, vmem_limit, bf16_alu, two_tc = _hw_config()
    native_mul = (x.dtype == jnp.float32) or bf16_alu
    sample_bytes = c * hw * jnp.dtype(x.dtype).itemsize
    fused_ok = (5 * sample_bytes) <= (vmem_limit - (2 << 20))

    if fused_ok and not force_two_pass:
        out = _awl_fused(x, w1, b1, w2, b2, target_bytes=target_bytes,
                         vmem_limit=vmem_limit, native_mul=native_mul,
                         two_tc=two_tc)
    else:
        out = _awl_two_pass(x, w1, b1, w2, b2, target_bytes=target_bytes,
                            vmem_limit=vmem_limit, native_mul=native_mul)
    return out.reshape(n, c, h, w)


def init_params(key):
    k1, k2, k3 = jax.random.split(key, 3)
    # SE-style 14->2->14 excitation (aux_weight_layer definition not in the
    # snippet); biases included so either bias=True or bias=False matches.
    w1 = jax.random.normal(k1, (HIDDEN, CHANNEL), jnp.float32) * (1.0 / CHANNEL) ** 0.5
    b1 = jax.random.normal(jax.random.fold_in(k1, 1), (HIDDEN,), jnp.float32) * 0.05
    w2 = jax.random.normal(k2, (CHANNEL, HIDDEN), jnp.float32) * (1.0 / HIDDEN) ** 0.5
    b2 = jax.random.normal(jax.random.fold_in(k2, 1), (CHANNEL,), jnp.float32) * 0.05
    # down_conv weight (1x1, 14->3, bias=False): defined for parity with
    # __init__, but the reference forward never applies it.
    down_conv_w = jax.random.normal(k3, (3, CHANNEL, 1, 1), jnp.float32) * (1.0 / CHANNEL) ** 0.5
    return {"awl_w1": w1, "awl_b1": b1, "awl_w2": w2, "awl_b2": b2,
            "down_conv_w": down_conv_w}


def aux_net_forward(x, params):
    y = aux_weight_layer_pallas(x, params["awl_w1"], params["awl_b1"],
                                params["awl_w2"], params["awl_b2"])
    # TODO(synk): `res18` backbone definition is not provided in the reference snippet; its forward is not reproduced here.
    return y


def awl_reference(x_nchw, w1, b1, w2, b2):
    """Pure-JAX reference of the SE gate for correctness checking."""
    s = jnp.mean(x_nchw.astype(jnp.float32), axis=(2, 3))          # (N, C)
    h = jnp.maximum(s @ w1.T + b1, 0.0)                            # (N, HIDDEN)
    a = jax.nn.sigmoid(h @ w2.T + b2)                              # (N, C)
    return (x_nchw.astype(jnp.float32) * a[:, :, None, None]).astype(x_nchw.dtype)


if __name__ == "__main__":
    key = jax.random.PRNGKey(0)
    kx, kp = jax.random.split(key)
    # small shapes consistent with the module: batch=2, channel=14, spatial=16
    x = jax.random.normal(kx, (2, CHANNEL, 16, 16), jnp.float32)
    params = init_params(kp)

    ref = awl_reference(x, params["awl_w1"], params["awl_b1"],
                        params["awl_w2"], params["awl_b2"])

    # fused single-pass path (default)
    out = jax.block_until_ready(aux_net_forward(x, params))
    assert out.shape == (2, CHANNEL, 16, 16)
    assert jnp.allclose(out, ref, atol=1e-5, rtol=1e-5)

    # two-pass fallback path (exercised explicitly for coverage)
    out2 = jax.block_until_ready(
        aux_weight_layer_pallas(x, params["awl_w1"], params["awl_b1"],
                                params["awl_w2"], params["awl_b2"],
                                force_two_pass=True))
    assert jnp.allclose(out2, ref, atol=1e-5, rtol=1e-5)

    print("KERNEL_OK")
</pallas_src>

<mosaic_0001>
module attributes {stable_mosaic.version = 11 : i64} {
  func.func @_fused_awl_kernel(%arg0: i32, %arg1: memref<2x14x1xf32, #tpu.memory_space<vmem>>, %arg2: memref<2x1x1xf32, #tpu.memory_space<vmem>>, %arg3: memref<2x14x1xf32, #tpu.memory_space<vmem>>, %arg4: memref<1x14x1xf32, #tpu.memory_space<vmem>>, %arg5: memref<2x14x256xf32, #tpu.memory_space<vmem>>, %arg6: memref<2x14x256xf32, #tpu.memory_space<vmem>>) attributes {dimension_semantics = [#tpu.dimension_semantics<parallel>], iteration_bounds = array<i64: 1>, scalar_prefetch = 0 : i64, scratch_operands = 0 : i64, tpu.core_type = #tpu.core_type<tc>, window_params = [{pipeline_mode = #tpu.pipeline_mode<synchronous>, transform_indices = @transform_0, window_bounds = array<i64: 2, 14, 1>}, {pipeline_mode = #tpu.pipeline_mode<synchronous>, transform_indices = @transform_1, window_bounds = array<i64: 2, 1, 1>}, {pipeline_mode = #tpu.pipeline_mode<synchronous>, transform_indices = @transform_2, window_bounds = array<i64: 2, 14, 1>}, {pipeline_mode = #tpu.pipeline_mode<synchronous>, transform_indices = @transform_3, window_bounds = array<i64: 1, 14, 1>}, {transform_indices = @transform_4, window_bounds = array<i64: 2, 14, 256>}, {transform_indices = @transform_5, window_bounds = array<i64: 2, 14, 256>}]} {
    %c0 = arith.constant 0 : index
    %c0_0 = arith.constant 0 : index
    %c0_1 = arith.constant 0 : index
    %0 = vector.load %arg5[%c0, %c0_0, %c0_1] : memref<2x14x256xf32, #tpu.memory_space<vmem>>, vector<2x14x256xf32>
    %cst = arith.constant dense<0.000000e+00> : vector<2x14xf32>
    %1 = vector.multi_reduction <add>, %0, %cst [2] : vector<2x14x256xf32> to vector<2x14xf32>
    %2 = vector.shape_cast %1 : vector<2x14xf32> to vector<2x14x1xf32>
    %cst_2 = arith.constant 3.906250e-03 : f32
    %3 = vector.broadcast %cst_2 : f32 to vector<2x14x1xf32>
    %4 = arith.mulf %2, %3 : vector<2x14x1xf32>
    %c0_3 = arith.constant 0 : index
    %c0_4 = arith.constant 0 : index
    %c0_5 = arith.constant 0 : index
    %5 = vector.load %arg1[%c0_3, %c0_4, %c0_5] : memref<2x14x1xf32, #tpu.memory_space<vmem>>, vector<2x14x1xf32>
    %c0_6 = arith.constant 0 : index
    %c0_7 = arith.constant 0 : index
    %c0_8 = arith.constant 0 : index
    %6 = vector.load %arg2[%c0_6, %c0_7, %c0_8] : memref<2x1x1xf32, #tpu.memory_space<vmem>>, vector<2x1x1xf32>
    %c0_9 = arith.constant 0 : index
    %c0_10 = arith.constant 0 : index
    %c0_11 = arith.constant 0 : index
    %7 = vector.load %arg3[%c0_9, %c0_10, %c0_11] : memref<2x14x1xf32, #tpu.memory_space<vmem>>, vector<2x14x1xf32>
    %c0_12 = arith.constant 0 : index
    %c0_13 = arith.constant 0 : index
    %c0_14 = arith.constant 0 : index
    %8 = vector.load %arg4[%c0_12, %c0_13, %c0_14] : memref<1x14x1xf32, #tpu.memory_space<vmem>>, vector<1x14x1xf32>
    %cst_15 = arith.constant 0.000000e+00 : f32
    %9 = vector.broadcast %cst_15 : f32 to vector<2x14x1xf32>
    %10 = vector.extract_strided_slice %5 {offsets = [0, 0, 0], sizes = [1, 14, 1], strides = [1, 1, 1]} : vector<2x14x1xf32> to vector<1x14x1xf32>
    %11 = vector.broadcast %10 : vector<1x14x1xf32> to vector<2x14x1xf32>
    %12 = arith.mulf %4, %11 : vector<2x14x1xf32>
    %cst_16 = arith.constant dense<0.000000e+00> : vector<2x1xf32>
    %13 = vector.multi_reduction <add>, %12, %cst_16 [1] : vector<2x14x1xf32> to vector<2x1xf32>
    %14 = vector.shape_cast %13 : vector<2x1xf32> to vector<2x1x1xf32>
    %15 = vector.extract_strided_slice %6 {offsets = [0, 0, 0], sizes = [1, 1, 1], strides = [1, 1, 1]} : vector<2x1x1xf32> to vector<1x1x1xf32>
    %16 = vector.broadcast %15 : vector<1x1x1xf32> to vector<2x1x1xf32>
    %17 = arith.addf %14, %16 : vector<2x1x1xf32>
    %cst_17 = arith.constant 0.000000e+00 : f32
    %18 = vector.broadcast %cst_17 : f32 to vector<2x1x1xf32>
    %19 = arith.maximumf %17, %18 : vector<2x1x1xf32>
    %20 = vector.extract_strided_slice %7 {offsets = [0, 0, 0], sizes = [1, 14, 1], strides = [1, 1, 1]} : vector<2x14x1xf32> to vector<1x14x1xf32>
    %21 = vector.broadcast %19 : vector<2x1x1xf32> to vector<2x14x1xf32>
    %22 = vector.broadcast %20 : vector<1x14x1xf32> to vector<2x14x1xf32>
    %23 = arith.mulf %21, %22 : vector<2x14x1xf32>
    %24 = arith.addf %9, %23 : vector<2x14x1xf32>
    %25 = vector.extract_strided_slice %5 {offsets = [1, 0, 0], sizes = [1, 14, 1], strides = [1, 1, 1]} : vector<2x14x1xf32> to vector<1x14x1xf32>
    %26 = vector.broadcast %25 : vector<1x14x1xf32> to vector<2x14x1xf32>
    %27 = arith.mulf %4, %26 : vector<2x14x1xf32>
    %cst_18 = arith.constant dense<0.000000e+00> : vector<2x1xf32>
    %28 = vector.multi_reduction <add>, %27, %cst_18 [1] : vector<2x14x1xf32> to vector<2x1xf32>
    %29 = vector.shape_cast %28 : vector<2x1xf32> to vector<2x1x1xf32>
    %30 = vector.extract_strided_slice %6 {offsets = [1, 0, 0], sizes = [1, 1, 1], strides = [1, 1, 1]} : vector<2x1x1xf32> to vector<1x1x1xf32>
    %31 = vector.broadcast %30 : vector<1x1x1xf32> to vector<2x1x1xf32>
    %32 = arith.addf %29, %31 : vector<2x1x1xf32>
    %cst_19 = arith.constant 0.000000e+00 : f32
    %33 = vector.broadcast %cst_19 : f32 to vector<2x1x1xf32>
    %34 = arith.maximumf %32, %33 : vector<2x1x1xf32>
    %35 = vector.extract_strided_slice %7 {offsets = [1, 0, 0], sizes = [1, 14, 1], strides = [1, 1, 1]} : vector<2x14x1xf32> to vector<1x14x1xf32>
    %36 = vector.broadcast %34 : vector<2x1x1xf32> to vector<2x14x1xf32>
    %37 = vector.broadcast %35 : vector<1x14x1xf32> to vector<2x14x1xf32>
    %38 = arith.mulf %36, %37 : vector<2x14x1xf32>
    %39 = arith.addf %24, %38 : vector<2x14x1xf32>
    %40 = vector.broadcast %8 : vector<1x14x1xf32> to vector<2x14x1xf32>
    %41 = arith.addf %39, %40 : vector<2x14x1xf32>
    %42 = arith.negf %41 : vector<2x14x1xf32>
    %43 = math.exp %42 : vector<2x14x1xf32>
    %cst_20 = arith.constant 1.000000e+00 : f32
    %44 = vector.broadcast %cst_20 : f32 to vector<2x14x1xf32>
    %45 = arith.addf %44, %43 : vector<2x14x1xf32>
    %46 = arith.divf %44, %45 : vector<2x14x1xf32>
    %47 = vector.broadcast %46 : vector<2x14x1xf32> to vector<2x14x256xf32>
    %48 = arith.mulf %0, %47 : vector<2x14x256xf32>
    %c0_21 = arith.constant 0 : index
    %c0_22 = arith.constant 0 : index
    %c0_23 = arith.constant 0 : index
    %49 = vector.load %arg6[%c0_21, %c0_22, %c0_23] : memref<2x14x256xf32, #tpu.memory_space<vmem>>, vector<2x14x256xf32>
    tpu.vector_store %arg6[%c0_21, %c0_22, %c0_23], %48 {strides = array<i32>} : memref<2x14x256xf32, #tpu.memory_space<vmem>>, vector<2x14x256xf32>,
    return
  }
  func.func @transform_0(%arg0: i32) -> (i32, i32, i32) {
    %c0_i32 = arith.constant 0 : i32
    %c0_i32_0 = arith.constant 0 : i32
    %c0_i32_1 = arith.constant 0 : i32
    %c0_i32_2 = arith.constant 0 : i32
    return %c0_i32, %c0_i32_0, %c0_i32_1 : i32, i32, i32
  }
  func.func @transform_1(%arg0: i32) -> (i32, i32, i32) {
    %c0_i32 = arith.constant 0 : i32
    %c0_i32_0 = arith.constant 0 : i32
    %c0_i32_1 = arith.constant 0 : i32
    %c0_i32_2 = arith.constant 0 : i32
    return %c0_i32, %c0_i32_0, %c0_i32_1 : i32, i32, i32
  }
  func.func @transform_2(%arg0: i32) -> (i32, i32, i32) {
    %c0_i32 = arith.constant 0 : i32
    %c0_i32_0 = arith.constant 0 : i32
    %c0_i32_1 = arith.constant 0 : i32
    %c0_i32_2 = arith.constant 0 : i32
    return %c0_i32, %c0_i32_0, %c0_i32_1 : i32, i32, i32
  }
  func.func @transform_3(%arg0: i32) -> (i32, i32, i32) {
    %c0_i32 = arith.constant 0 : i32
    %c0_i32_0 = arith.constant 0 : i32
    %c0_i32_1 = arith.constant 0 : i32
    %c0_i32_2 = arith.constant 0 : i32
    return %c0_i32, %c0_i32_0, %c0_i32_1 : i32, i32, i32
  }
  func.func @transform_4(%arg0: i32) -> (i32, i32, i32) {
    %c0_i32 = arith.constant 0 : i32
    %c0_i32_0 = arith.constant 0 : i32
    %c0_i32_1 = arith.constant 0 : i32
    return %arg0, %c0_i32, %c0_i32_0 : i32, i32, i32
  }
  func.func @transform_5(%arg0: i32) -> (i32, i32, i32) {
    %c0_i32 = arith.constant 0 : i32
    %c0_i32_0 = arith.constant 0 : i32
    %c0_i32_1 = arith.constant 0 : i32
    return %arg0, %c0_i32, %c0_i32_0 : i32, i32, i32
  }
}

</mosaic_0001>

<llo_original>
// kernel: tpu_custom_call.1
$region0: #{tpu_custom_call.1}
  #allocation0 [shape = 'u32[]', space=smem, size = 0x4, offset = 0x4, fixed_abs, tag = 'smem constant byte address 0x4 - core index']
  #allocation1 [shape = 'u32[144,128]{1,0:T(1,128)}', space=vmem, size = 0x12000, scoped, tag = 'internal scratch']
  %s0 = inlined_call_operand.vmem [shape: f32[2,14,1], index: 0, kind: input, shape index: {}]
  %s1 = inlined_call_operand.vmem [shape: f32[2,1,1], index: 1, kind: input, shape index: {}]
  %s2 = inlined_call_operand.vmem [shape: f32[2,14,1], index: 2, kind: input, shape index: {}]
  %s3 = inlined_call_operand.vmem [shape: f32[1,14,1], index: 3, kind: input, shape index: {}]
  %s4 = inlined_call_operand.vmem [shape: f32[2,14,256], index: 4, kind: input, shape index: {}]
  %s5 = inlined_call_operand.vmem [shape: f32[2,14,256], index: 5, kind: output, shape index: {}]
  %s6 = sld [smem:[#allocation0]]
  $region30: #{tpu_custom_call.1} parent=0
    _
  %s8 = ssub.s32 1, %s6
  %s9 = scalar_select 0, %s8, %s6
  // Predicated region
  $region2: #{tpu_custom_call.1} parent=0 // pred_check
    _
  $region3: #{tpu_custom_call.1} parent=0 // pred_check_branch
    %11 = sbr.rel (0) target = $region5
  $region4: #{tpu_custom_call.1} parent=0 // pred_region
    _
  $region5: #{tpu_custom_call.1} parent=0 // pred_fallthru
    _
  // Predicated region
  $region6: #{tpu_custom_call.1} parent=0 // pred_check
    _
  $region7: #{tpu_custom_call.1} parent=0 // pred_check_branch
    %13 = sbr.rel (0) target = $region9
  $region8: #{tpu_custom_call.1} parent=0 // pred_region
    _
  $region9: #{tpu_custom_call.1} parent=0 // pred_fallthru
    _
  // Predicated region
  $region10: #{tpu_custom_call.1} parent=0 // pred_check
    _
  $region11: #{tpu_custom_call.1} parent=0 // pred_check_branch
    %15 = sbr.rel (0) target = $region13
  $region12: #{tpu_custom_call.1} parent=0 // pred_region
    _
  $region13: #{tpu_custom_call.1} parent=0 // pred_fallthru
    _
  // Predicated region
  $region14: #{tpu_custom_call.1} parent=0 // pred_check
    _
  $region15: #{tpu_custom_call.1} parent=0 // pred_check_branch
    %17 = sbr.rel (0) target = $region17
  $region16: #{tpu_custom_call.1} parent=0 // pred_region
    _
  $region17: #{tpu_custom_call.1} parent=0 // pred_fallthru
    _
  // Predicated region
  $region18: #{tpu_custom_call.1} parent=0 // pred_check
    _
  $region19: #{tpu_custom_call.1} parent=0 // pred_check_branch
    %19 = sbr.rel (0) target = $region21
  $region20: #{tpu_custom_call.1} parent=0 // pred_region
    _
  $region21: #{tpu_custom_call.1} parent=0 // pred_fallthru
    _
  %v20 = vld [vmem:[%s4] sm:$0xff]
  %v21 = vld [vmem:[%s4 + $0x8] sm:$0xff]
  %v22 = vld [vmem:[%s4 + $0x10] sm:$0x3f]
  %v23 = vld [vmem:[%s4 + $0x18] sm:$0x3f]
  %v24 = vld [vmem:[%s4 + $0x20] sm:$0xff]
  %v25 = vld [vmem:[%s4 + $0x28] sm:$0xff]
  %v26 = vld [vmem:[%s4 + $0x30] sm:$0x3f]
  %v27 = vld [vmem:[%s4 + $0x38] sm:$0x3f]
  %v28 = vadd.f32 %v20, %v21
  %29 = vadd.xlane.f32.xlu0 %v28
  %v30 = vpop.xlane.xlu0 %29
  %vm31 = vcmask 1045504
  %v32 = vsel %vm31, %v22, 0.0
  %v33 = vsel %vm31, %v23, 0.0
  %v34 = vadd.f32 %v32, %v33
  %35 = vadd.xlane.f32.xlu0 %v34
  %v36 = vpop.xlane.xlu0 %35
  %v37 = vadd.f32 %v24, %v25
  %38 = vadd.xlane.f32.xlu0 %v37
  %v39 = vpop.xlane.xlu0 %38
  %v40 = vsel %vm31, %v26, 0.0
  %v41 = vsel %vm31, %v27, 0.0
  %v42 = vadd.f32 %v40, %v41
  %43 = vadd.xlane.f32.xlu0 %v42
  %v44 = vpop.xlane.xlu0 %43
  %v45 = vmul.f32 %v30, 0.00390625
  %v46 = vmul.f32 %v36, 0.00390625
  %v47 = vmul.f32 %v39, 0.00390625
  %v48 = vmul.f32 %v44, 0.00390625
  %v49 = vld [vmem:[%s0] sm:$0xff]
  %v50 = vld [vmem:[%s0 + $0x8] sm:$0x3f]
  %v51 = vld [vmem:[%s0 + $0x10] sm:$0xff]
  %v52 = vld [vmem:[%s0 + $0x18] sm:$0x3f]
  %v53 = vld [vmem:[%s1] sm:$0x1]
  %v54 = vld [vmem:[%s1 + $0x1] sm:$0x1]
  %v55 = vld [vmem:[%s2] sm:$0xff]
  %v56 = vld [vmem:[%s2 + $0x8] sm:$0x3f]
  %v57 = vld [vmem:[%s2 + $0x10] sm:$0xff]
  %v58 = vld [vmem:[%s2 + $0x18] sm:$0x3f]
  %v59 = vld [vmem:[%s3] sm:$0xff]
  %v60 = vld [vmem:[%s3 + $0x8] sm:$0x3f]
  %v61 = vmul.f32 %v45, %v49
  %v62 = vmul.f32 %v46, %v50
  %v63 = vmul.f32 %v47, %v49
  %v64 = vmul.f32 %v48, %v50
  %vm65 = vcmask 7168
  %v66 = vsel %vm65, %v61, 0.0
  %vm67 = vcmask 5120
  %v68 = vsel %vm67, %v62, 0.0
  %v69 = vadd.f32 %v66, %v68
  %v70 = vrot.slane %v69, 4
  %v71 = vadd.f32 %v69, %v70
  %v72 = vrot.slane %v71, 2
  %v73 = vadd.f32 %v71, %v72
  %v74 = vrot.slane %v73, 1
  %v75 = vadd.f32 %v73, %v74
  %v76 = vsel %vm65, %v63, 0.0
  %v77 = vsel %vm67, %v64, 0.0
  %v78 = vadd.f32 %v76, %v77
  %v79 = vrot.slane %v78, 4
  %v80 = vadd.f32 %v78, %v79
  %v81 = vrot.slane %v80, 2
  %v82 = vadd.f32 %v80, %v81
  %v83 = vrot.slane %v82, 1
  %v84 = vadd.f32 %v82, %v83
  %v85 = vadd.f32 %v75, %v53
  %v86 = vadd.f32 %v84, %v53
  %v87 = vmax.f32 %v85, 0.0
  %v88 = vmax.f32 %v86, 0.0
  %v89 = vlaneseq
  %v90 = vshrl.u32 %v89, 7
  %v91 = vsub.s32 0, %v90
  %v92 = vrot.slane %v87, %v91
  %v93 = vlaneseq
  %v94 = vshrl.u32 %v93, 7
  %v95 = vsub.s32 0, %v94
  %v96 = vrot.slane %v88, %v95
  %v97 = vmul.f32 %v92, %v55
  %v98 = vmul.f32 %v92, %v56
  %v99 = vmul.f32 %v96, %v55
  %v100 = vmul.f32 %v96, %v56
  %v101 = vadd.f32 %v97, 0.0
  %v102 = vadd.f32 %v98, 0.0
  %v103 = vadd.f32 %v99, 0.0
  %v104 = vadd.f32 %v100, 0.0
  %v105 = vmul.f32 %v45, %v51
  %v106 = vmul.f32 %v46, %v52
  %v107 = vmul.f32 %v47, %v51
  %v108 = vmul.f32 %v48, %v52
  %v109 = vsel %vm65, %v105, 0.0
  %v110 = vsel %vm67, %v106, 0.0
  %v111 = vadd.f32 %v109, %v110
  %v112 = vrot.slane %v111, 4
  %v113 = vadd.f32 %v111, %v112
  %v114 = vrot.slane %v113, 2
  %v115 = vadd.f32 %v113, %v114
  %v116 = vrot.slane %v115, 1
  %v117 = vadd.f32 %v115, %v116
  %v118 = vsel %vm65, %v107, 0.0
  %v119 = vsel %vm67, %v108, 0.0
  %v120 = vadd.f32 %v118, %v119
  %v121 = vrot.slane %v120, 4
  %v122 = vadd.f32 %v120, %v121
  %v123 = vrot.slane %v122, 2
  %v124 = vadd.f32 %v122, %v123
  %v125 = vrot.slane %v124, 1
  %v126 = vadd.f32 %v124, %v125
  %v127 = vadd.f32 %v117, %v54
  %v128 = vadd.f32 %v126, %v54
  %v129 = vmax.f32 %v127, 0.0
  %v130 = vmax.f32 %v128, 0.0
  %v131 = vlaneseq
  %v132 = vshrl.u32 %v131, 7
  %v133 = vsub.s32 0, %v132
  %v134 = vrot.slane %v129, %v133
  %v135 = vlaneseq
  %v136 = vshrl.u32 %v135, 7
  %v137 = vsub.s32 0, %v136
  %v138 = vrot.slane %v130, %v137
  %v139 = vmul.f32 %v134, %v57
  %v140 = vmul.f32 %v134, %v58
  %v141 = vmul.f32 %v138, %v57
  %v142 = vmul.f32 %v138, %v58
  %v143 = vadd.f32 %v101, %v139
  %v144 = vadd.f32 %v102, %v140
  %v145 = vadd.f32 %v103, %v141
  %v146 = vadd.f32 %v104, %v142
  %v147 = vadd.f32 %v143, %v59
  %v148 = vadd.f32 %v144, %v60
  %v149 = vadd.f32 %v145, %v59
  %v150 = vadd.f32 %v146, %v60
  %v151 = vxor.u32 %v147, 2147483648
  %v152 = vxor.u32 %v148, 2147483648
  %v153 = vxor.u32 %v149, 2147483648
  %v154 = vxor.u32 %v150, 2147483648
  %v155 = vmul.f32 %v151, 1.442695
  %v156 = vpow.pop %v155
  %v157 = vmul.f32 %v152, 1.442695
  %v158 = vpow.pop %v157
  %v159 = vmul.f32 %v153, 1.442695
  %v160 = vpow.pop %v159
  %v161 = vmul.f32 %v154, 1.442695
  %v162 = vpow.pop %v161
  %v163 = vadd.f32 %v156, 1.0
  %v164 = vadd.f32 %v158, 1.0
  %v165 = vadd.f32 %v160, 1.0
  %v166 = vadd.f32 %v162, 1.0
  %v167 = vrcp.pop %v163
  %v168 = vmul.f32 1.0, %v167
  %v169 = vrcp.pop %v164
  %v170 = vmul.f32 1.0, %v169
  %v171 = vrcp.pop %v165
  %v172 = vmul.f32 1.0, %v171
  %v173 = vrcp.pop %v166
  %v174 = vmul.f32 1.0, %v173
  %176 = vset.pattern.permute.xlu0 0
  %177 = vperm.xlu0 %176, %v168
  %v178 = vpop.permute.xlu0 %177
  %181 = vset.pattern.permute.xlu0 0
  %182 = vperm.xlu0 %181, %v170
  %v183 = vpop.permute.xlu0 %182
  %186 = vset.pattern.permute.xlu0 0
  %187 = vperm.xlu0 %186, %v172
  %v188 = vpop.permute.xlu0 %187
  %191 = vset.pattern.permute.xlu0 0
  %192 = vperm.xlu0 %191, %v174
  %v193 = vpop.permute.xlu0 %192
  %v195 = vmul.f32 %v20, %v178
  %v196 = vmul.f32 %v21, %v178
  %v197 = vmul.f32 %v22, %v183
  %v198 = vmul.f32 %v23, %v183
  %v199 = vmul.f32 %v24, %v188
  %v200 = vmul.f32 %v25, %v188
  %v201 = vmul.f32 %v26, %v193
  %v202 = vmul.f32 %v27, %v193
  %203 = vst [vmem:[%s5] sm:$0xff] %v195
  %204 = vst [vmem:[%s5 + $0x8] sm:$0xff] %v196
  %205 = vst [vmem:[%s5 + $0x10] sm:$0x3f] %v197
  %206 = vst [vmem:[%s5 + $0x18] sm:$0x3f] %v198
  %207 = vst [vmem:[%s5 + $0x20] sm:$0xff] %v199
  %208 = vst [vmem:[%s5 + $0x28] sm:$0xff] %v200
  %209 = vst [vmem:[%s5 + $0x30] sm:$0x3f] %v201
  %210 = vst [vmem:[%s5 + $0x38] sm:$0x3f] %v202
  // Predicated region
  $region22: #{tpu_custom_call.1} parent=0 // pred_check
    _
  $region23: #{tpu_custom_call.1} parent=0 // pred_check_branch
    %212 = sbr.rel (0) target = $region25
  $region24: #{tpu_custom_call.1} parent=0 // pred_region
    _
  $region25: #{tpu_custom_call.1} parent=0 // pred_fallthru
    _
  // Predicated region
  $region26: #{tpu_custom_call.1} parent=0 // pred_check
    _
  $region27: #{tpu_custom_call.1} parent=0 // pred_check_branch
    %214 = sbr.rel (0) target = $region29
  $region28: #{tpu_custom_call.1} parent=0 // pred_region
    _
  $region29: #{tpu_custom_call.1} parent=0 // pred_fallthru
    _

</llo_original>
